<compile_context>
chip_gen: v5e
topology: v5e:2x2
jax: 0.10.0
libtpu: 0.0.40
codegen_flags: <defaults>
</compile_context>

<pallas_src>
import math

import jax
import jax.numpy as jnp
from jax.experimental import pallas as pl
from jax.experimental.pallas import tpu as pltpu


def _round_up(x, m):
    return (x + m - 1) // m * m


def _generator_kernel(x_ref, w1_ref, b1_ref, w2_ref, b2_ref, w3_ref, b3_ref,
                      out_ref):
    # layer 1: single fused contraction over K = Du + H*Di + Dn
    # (history mean already folded into w1 by the wrapper), f32 accumulation.
    h1 = jnp.dot(x_ref[...], w1_ref[...], preferred_element_type=jnp.float32)
    h1 = jnp.maximum(h1 + b1_ref[...], 0.0).astype(w2_ref.dtype)

    # layer 2
    h2 = jnp.dot(h1, w2_ref[...], preferred_element_type=jnp.float32)
    h2 = jnp.maximum(h2 + b2_ref[...], 0.0).astype(w3_ref.dtype)

    # layer 3 (no activation); output block is lane-dense (padded to 128).
    out_ref[...] = (jnp.dot(h2, w3_ref[...], preferred_element_type=jnp.float32)
                    + b3_ref[...]).astype(out_ref.dtype)


def make_params(key, user_dim, item_dim, noise_size):
    """PyTorch-equivalent params; weights stored transposed as (in, out)."""
    size_l1 = user_dim + item_dim + noise_size
    size_l2 = int(math.pow(2, round(math.log2((size_l1 + item_dim) / 2))))
    ks = jax.random.split(key, 6)
    scale = 0.05
    params = {
        "w1": jax.random.normal(ks[0], (size_l1, size_l2), jnp.float32) * scale,
        "b1": jax.random.normal(ks[1], (1, size_l2), jnp.float32) * scale,
        "w2": jax.random.normal(ks[2], (size_l2, size_l2), jnp.float32) * scale,
        "b2": jax.random.normal(ks[3], (1, size_l2), jnp.float32) * scale,
        "w3": jax.random.normal(ks[4], (size_l2, item_dim), jnp.float32) * scale,
        "b3": jax.random.normal(ks[5], (1, item_dim), jnp.float32) * scale,
    }
    return params, size_l1, size_l2


def prepare_kernel_params(params, user_dim, item_dim, hist_len):
    """One-time repack of params into kernel-ready tensors.

    * mean-pool folded into layer 1: the summary rows of W1 are tiled over the
      history axis and divided by H, so hist.reshape(B, H*Di) @ w1s_tiled ==
      mean(hist, axis=1) @ w1s exactly (in exact arithmetic).
    * hidden/output widths zero-padded to multiples of 128 (lane-dense).
    * weights -> bf16 (f32 accumulation in-kernel); biases stay f32.
    """
    L2 = params["w2"].shape[0]
    Do = params["w3"].shape[1]
    L2p = _round_up(L2, 128)
    Dop = _round_up(Do, 128)

    w1u = params["w1"][:user_dim]
    w1s = params["w1"][user_dim:user_dim + item_dim]
    w1n = params["w1"][user_dim + item_dim:]
    w1s_tiled = jnp.tile(w1s, (hist_len, 1)) / float(hist_len)   # (H*Di, L2)
    w1_eff = jnp.concatenate([w1u, w1s_tiled, w1n], axis=0)      # (Du+H*Di+Dn, L2)

    def pad2(a, rows, cols):
        return jnp.pad(a, ((0, rows - a.shape[0]), (0, cols - a.shape[1])))

    kparams = {
        "w1": pad2(w1_eff, w1_eff.shape[0], L2p).astype(jnp.bfloat16),
        "b1": pad2(params["b1"], 1, L2p),                        # f32
        "w2": pad2(params["w2"], L2p, L2p).astype(jnp.bfloat16),
        "b2": pad2(params["b2"], 1, L2p),                        # f32
        "w3": pad2(params["w3"], L2p, Dop).astype(jnp.bfloat16),
        "b3": pad2(params["b3"], 1, Dop),                        # f32
    }
    return kparams, Do


def generator_forward(user_table, item_table, kparams, out_dim,
                      user_id, history, noise, *, batch_tile=256):
    """Embedding gathers + concat in plain JAX, then one batch-tiled Pallas
    kernel for the fused 3-layer MLP."""
    # TODO(synk): for large item tables / long histories, fuse this gather into
    # the kernel (item_table in pl.ANY + scalar-prefetched indices) to avoid
    # materializing (B, H, Di) in HBM and re-reading it.
    user_e = jnp.take(user_table, user_id, axis=0)               # (B, Du)
    hist_e = jnp.take(item_table, history, axis=0)               # (B, H, Di)

    B, H = history.shape
    Di = item_table.shape[1]
    x = jnp.concatenate(
        [user_e, hist_e.reshape(B, H * Di), noise], axis=-1
    ).astype(jnp.bfloat16)                                       # (B, K)
    K = x.shape[1]
    Dop = kparams["w3"].shape[1]

    TB = min(_round_up(B, 8), batch_tile)
    grid = (pl.cdiv(B, TB),)

    def resident(arr):   # weights/biases: DMA'd once, VMEM-resident across grid
        return pl.BlockSpec(arr.shape, lambda i: (0, 0))

    out_padded = pl.pallas_call(
        _generator_kernel,
        out_shape=jax.ShapeDtypeStruct((B, Dop), jnp.float32),
        grid=grid,
        in_specs=[pl.BlockSpec((TB, K), lambda i: (i, 0)),
                  resident(kparams["w1"]), resident(kparams["b1"]),
                  resident(kparams["w2"]), resident(kparams["b2"]),
                  resident(kparams["w3"]), resident(kparams["b3"])],
        out_specs=pl.BlockSpec((TB, Dop), lambda i: (i, 0)),
        compiler_params=pltpu.CompilerParams(
            dimension_semantics=("parallel",)),
    )(x, kparams["w1"], kparams["b1"], kparams["w2"], kparams["b2"],
      kparams["w3"], kparams["b3"])

    return out_padded[:, :out_dim]


def reference_forward(user_table, item_table, params, user_id, history, noise):
    """Pure-JAX f32 reference (matches the PyTorch module with mean-pool
    summarizer)."""
    u = jnp.take(user_table, user_id, axis=0)
    s = jnp.take(item_table, history, axis=0).mean(axis=1)
    x = jnp.concatenate([u, s, noise], axis=-1)
    x = jnp.maximum(x @ params["w1"] + params["b1"], 0.0)
    x = jnp.maximum(x @ params["w2"] + params["b2"], 0.0)
    return x @ params["w3"] + params["b3"]


if __name__ == "__main__":
    key = jax.random.PRNGKey(0)
    k_user, k_item, k_params, k_uid, k_hist, k_noise = jax.random.split(key, 6)

    # small, module-consistent shapes
    num_users, num_items = 32, 64
    user_dim, item_dim, noise_size = 16, 16, 32
    B, H = 8, 8

    user_table = jax.random.normal(k_user, (num_users, user_dim), jnp.float32)
    item_table = jax.random.normal(k_item, (num_items, item_dim), jnp.float32)
    params, size_l1, size_l2 = make_params(k_params, user_dim, item_dim,
                                           noise_size)
    kparams, out_dim = prepare_kernel_params(params, user_dim, item_dim, H)

    user_id = jax.random.randint(k_uid, (B,), 0, num_users)
    history = jax.random.randint(k_hist, (B, H), 0, num_items)
    noise = jax.random.normal(k_noise, (B, noise_size), jnp.float32)

    out = generator_forward(user_table, item_table, kparams, out_dim,
                            user_id, history, noise)
    out = jax.block_until_ready(out)

    ref = reference_forward(user_table, item_table, params, user_id, history,
                            noise)
    assert out.shape == (B, item_dim), out.shape
    # bf16 matmul operands (f32 accumulation) -> compare with a relative bound.
    max_err = float(jnp.max(jnp.abs(out - ref)))
    scale = float(jnp.max(jnp.abs(ref))) + 1e-6
    assert max_err / scale < 2e-2, (max_err, scale)

    print("KERNEL_OK")
</pallas_src>

<mosaic_0001>
module attributes {stable_mosaic.version = 11 : i64} {
  func.func @_generator_kernel(%arg0: i32, %arg1: memref<8x176xbf16, #tpu.memory_space<vmem>>, %arg2: memref<176x128xbf16, #tpu.memory_space<vmem>>, %arg3: memref<1x128xf32, #tpu.memory_space<vmem>>, %arg4: memref<128x128xbf16, #tpu.memory_space<vmem>>, %arg5: memref<1x128xf32, #tpu.memory_space<vmem>>, %arg6: memref<128x128xbf16, #tpu.memory_space<vmem>>, %arg7: memref<1x128xf32, #tpu.memory_space<vmem>>, %arg8: memref<8x128xf32, #tpu.memory_space<vmem>>) attributes {dimension_semantics = [#tpu.dimension_semantics<parallel>], iteration_bounds = array<i64: 1>, scalar_prefetch = 0 : i64, scratch_operands = 0 : i64, tpu.core_type = #tpu.core_type<tc>, window_params = [{transform_indices = @transform_0, window_bounds = array<i64: 8, 176>}, {pipeline_mode = #tpu.pipeline_mode<synchronous>, transform_indices = @transform_1, window_bounds = array<i64: 176, 128>}, {pipeline_mode = #tpu.pipeline_mode<synchronous>, transform_indices = @transform_2, window_bounds = array<i64: 1, 128>}, {pipeline_mode = #tpu.pipeline_mode<synchronous>, transform_indices = @transform_3, window_bounds = array<i64: 128, 128>}, {pipeline_mode = #tpu.pipeline_mode<synchronous>, transform_indices = @transform_4, window_bounds = array<i64: 1, 128>}, {pipeline_mode = #tpu.pipeline_mode<synchronous>, transform_indices = @transform_5, window_bounds = array<i64: 128, 128>}, {pipeline_mode = #tpu.pipeline_mode<synchronous>, transform_indices = @transform_6, window_bounds = array<i64: 1, 128>}, {transform_indices = @transform_7, window_bounds = array<i64: 8, 128>}]} {
    %c0 = arith.constant 0 : index
    %c0_0 = arith.constant 0 : index
    %0 = vector.load %arg1[%c0, %c0_0] : memref<8x176xbf16, #tpu.memory_space<vmem>>, vector<8x176xbf16>
    %c0_1 = arith.constant 0 : index
    %c0_2 = arith.constant 0 : index
    %1 = vector.load %arg2[%c0_1, %c0_2] : memref<176x128xbf16, #tpu.memory_space<vmem>>, vector<176x128xbf16>
    %cst = arith.constant dense<0.000000e+00> : vector<8x128xf32>
    %2 = tpu.matmul %0, %1, %cst {dimension_numbers = #tpu.dot_dimension_numbers<[1], [0], [0], [1], [0, 0, 1, 1], [], []>} : vector<8x176xbf16>, vector<176x128xbf16>, vector<8x128xf32> -> vector<8x128xf32>
    %c0_3 = arith.constant 0 : index
    %c0_4 = arith.constant 0 : index
    %3 = vector.load %arg3[%c0_3, %c0_4] : memref<1x128xf32, #tpu.memory_space<vmem>>, vector<1x128xf32>
    %4 = vector.broadcast %3 : vector<1x128xf32> to vector<8x128xf32>
    %5 = arith.addf %2, %4 : vector<8x128xf32>
    %cst_5 = arith.constant 0.000000e+00 : f32
    %6 = vector.broadcast %cst_5 : f32 to vector<8x128xf32>
    %7 = arith.maximumf %5, %6 : vector<8x128xf32>
    %8 = arith.truncf %7 : vector<8x128xf32> to vector<8x128xbf16>
    %c0_6 = arith.constant 0 : index
    %c0_7 = arith.constant 0 : index
    %9 = vector.load %arg4[%c0_6, %c0_7] : memref<128x128xbf16, #tpu.memory_space<vmem>>, vector<128x128xbf16>
    %cst_8 = arith.constant dense<0.000000e+00> : vector<8x128xf32>
    %10 = tpu.matmul %8, %9, %cst_8 {dimension_numbers = #tpu.dot_dimension_numbers<[1], [0], [0], [1], [0, 0, 1, 1], [], []>} : vector<8x128xbf16>, vector<128x128xbf16>, vector<8x128xf32> -> vector<8x128xf32>
    %c0_9 = arith.constant 0 : index
    %c0_10 = arith.constant 0 : index
    %11 = vector.load %arg5[%c0_9, %c0_10] : memref<1x128xf32, #tpu.memory_space<vmem>>, vector<1x128xf32>
    %12 = vector.broadcast %11 : vector<1x128xf32> to vector<8x128xf32>
    %13 = arith.addf %10, %12 : vector<8x128xf32>
    %cst_11 = arith.constant 0.000000e+00 : f32
    %14 = vector.broadcast %cst_11 : f32 to vector<8x128xf32>
    %15 = arith.maximumf %13, %14 : vector<8x128xf32>
    %16 = arith.truncf %15 : vector<8x128xf32> to vector<8x128xbf16>
    %c0_12 = arith.constant 0 : index
    %c0_13 = arith.constant 0 : index
    %17 = vector.load %arg6[%c0_12, %c0_13] : memref<128x128xbf16, #tpu.memory_space<vmem>>, vector<128x128xbf16>
    %cst_14 = arith.constant dense<0.000000e+00> : vector<8x128xf32>
    %18 = tpu.matmul %16, %17, %cst_14 {dimension_numbers = #tpu.dot_dimension_numbers<[1], [0], [0], [1], [0, 0, 1, 1], [], []>} : vector<8x128xbf16>, vector<128x128xbf16>, vector<8x128xf32> -> vector<8x128xf32>
    %c0_15 = arith.constant 0 : index
    %c0_16 = arith.constant 0 : index
    %19 = vector.load %arg7[%c0_15, %c0_16] : memref<1x128xf32, #tpu.memory_space<vmem>>, vector<1x128xf32>
    %20 = vector.broadcast %19 : vector<1x128xf32> to vector<8x128xf32>
    %21 = arith.addf %18, %20 : vector<8x128xf32>
    %c0_17 = arith.constant 0 : index
    %c0_18 = arith.constant 0 : index
    %22 = vector.load %arg8[%c0_17, %c0_18] : memref<8x128xf32, #tpu.memory_space<vmem>>, vector<8x128xf32>
    tpu.vector_store %arg8[%c0_17, %c0_18], %21 {strides = array<i32>} : memref<8x128xf32, #tpu.memory_space<vmem>>, vector<8x128xf32>,
    return
  }
  func.func @transform_0(%arg0: i32) -> (i32, i32) {
    %c0_i32 = arith.constant 0 : i32
    %c0_i32_0 = arith.constant 0 : i32
    return %arg0, %c0_i32 : i32, i32
  }
  func.func @transform_1(%arg0: i32) -> (i32, i32) {
    %c0_i32 = arith.constant 0 : i32
    %c0_i32_0 = arith.constant 0 : i32
    %c0_i32_1 = arith.constant 0 : i32
    return %c0_i32, %c0_i32_0 : i32, i32
  }
  func.func @transform_2(%arg0: i32) -> (i32, i32) {
    %c0_i32 = arith.constant 0 : i32
    %c0_i32_0 = arith.constant 0 : i32
    %c0_i32_1 = arith.constant 0 : i32
    return %c0_i32, %c0_i32_0 : i32, i32
  }
  func.func @transform_3(%arg0: i32) -> (i32, i32) {
    %c0_i32 = arith.constant 0 : i32
    %c0_i32_0 = arith.constant 0 : i32
    %c0_i32_1 = arith.constant 0 : i32
    return %c0_i32, %c0_i32_0 : i32, i32
  }
  func.func @transform_4(%arg0: i32) -> (i32, i32) {
    %c0_i32 = arith.constant 0 : i32
    %c0_i32_0 = arith.constant 0 : i32
    %c0_i32_1 = arith.constant 0 : i32
    return %c0_i32, %c0_i32_0 : i32, i32
  }
  func.func @transform_5(%arg0: i32) -> (i32, i32) {
    %c0_i32 = arith.constant 0 : i32
    %c0_i32_0 = arith.constant 0 : i32
    %c0_i32_1 = arith.constant 0 : i32
    return %c0_i32, %c0_i32_0 : i32, i32
  }
  func.func @transform_6(%arg0: i32) -> (i32, i32) {
    %c0_i32 = arith.constant 0 : i32
    %c0_i32_0 = arith.constant 0 : i32
    %c0_i32_1 = arith.constant 0 : i32
    return %c0_i32, %c0_i32_0 : i32, i32
  }
  func.func @transform_7(%arg0: i32) -> (i32, i32) {
    %c0_i32 = arith.constant 0 : i32
    %c0_i32_0 = arith.constant 0 : i32
    return %arg0, %c0_i32 : i32, i32
  }
}

</mosaic_0001>

<llo_original>
// kernel: tpu_custom_call.1
$region0: #{tpu_custom_call.1}
  #allocation0 [shape = 'u32[]', space=smem, size = 0x4, offset = 0x4, fixed_abs, tag = 'smem constant byte address 0x4 - core index']
  #allocation1 [shape = 'u32[72,128]{1,0:T(1,128)}', space=vmem, size = 0x9000, scoped, tag = 'internal scratch']
  %s0 = inlined_call_operand.hbm [shape: bf16[8,176], index: 0, kind: input, shape index: {}]
  %s1 = inlined_call_operand.hbm [shape: bf16[176,128], index: 1, kind: input, shape index: {}]
  %s2 = inlined_call_operand.vmem [shape: f32[1,128], index: 2, kind: input, shape index: {}]
  %s3 = inlined_call_operand.hbm [shape: bf16[128,128], index: 3, kind: input, shape index: {}]
  %s4 = inlined_call_operand.vmem [shape: f32[1,128], index: 4, kind: input, shape index: {}]
  %s5 = inlined_call_operand.hbm [shape: bf16[128,128], index: 5, kind: input, shape index: {}]
  %s6 = inlined_call_operand.vmem [shape: f32[1,128], index: 6, kind: input, shape index: {}]
  %s7 = inlined_call_operand.hbm [shape: f32[8,128], index: 7, kind: output, shape index: {}]
  %s8 = sld [smem:[#allocation0]]
  $region54: #{tpu_custom_call.1} parent=0
    _
  %s10 = ssub.s32 1, %s8
  %s11 = scalar_select 0, %s10, %s8
  $region1: #{tpu_custom_call.1} parent=0
    #allocation2 [shape = 'u8[4096]{0}', space=vmem, size = 0x1000, scoped, tag = 'input window, operand 0, single buffered']
    #allocation3 [shape = 's32[1]{0}', space=sflag, size = 0x4, scoped, tag = 'scoped memory for tpu_custom_call.1']
    #allocation4 [shape = 's32[1]{0}', space=sflag, size = 0x4, scoped, tag = 'scoped memory for tpu_custom_call.1']
    #allocation5 [shape = 'u8[45056]{0}', space=vmem, size = 0xb000, scoped, tag = 'input window, operand 1, single buffered']
    #allocation6 [shape = 's32[1]{0}', space=sflag, size = 0x4, scoped, tag = 'scoped memory for tpu_custom_call.1']
    #allocation7 [shape = 'u8[32768]{0}', space=vmem, size = 0x8000, scoped, tag = 'input window, operand 3, single buffered']
    #allocation8 [shape = 'u8[32768]{0}', space=vmem, size = 0x8000, scoped, tag = 'input window, operand 5, single buffered']
    #allocation9 [shape = 's32[1]{0}', space=sflag, size = 0x4, scoped, tag = 'scoped memory for tpu_custom_call.1']
    #allocation10 [shape = 'u8[4096]{0}', space=vmem, size = 0x1000, scoped, tag = 'output window, operand 0, single buffered']
    %12 = vsyncpa [#allocation3], 0
    %13 = vsyncpa [#allocation6], 0
    %14 = vsyncpa [#allocation9], 0
    %15 = vsyncpa [#allocation4], 0
    // Predicated region
    $region2: #{tpu_custom_call.1} parent=1 // pred_check
      _
    $region3: #{tpu_custom_call.1} parent=1 // pred_check_branch
      %17 = sbr.rel (0) target = $region5
    $region4: #{tpu_custom_call.1} parent=1 // pred_region
      %19 = vsyncadd [#allocation3], 0
      %s21 = sshll.u32 %s0, 4
      %s22 = int_to_ptr.hbm [resolvable:$true] %s21
      %s23 = sshll.u32 [#allocation2], 4
      %s24 = int_to_ptr.vmem [resolvable:$true] %s23
      %26 = dma.hbm_to_vmem [thread:$0]  %s22, 128, %s24, [#allocation3]
    $region5: #{tpu_custom_call.1} parent=1 // pred_fallthru
      _
    // Predicated region
    $region6: #{tpu_custom_call.1} parent=1 // pred_check
      _
    $region7: #{tpu_custom_call.1} parent=1 // pred_check_branch
      %28 = sbr.rel (0) target = $region9
    $region8: #{tpu_custom_call.1} parent=1 // pred_region
      %30 = vsyncadd [#allocation6], 0
      %s31 = sshll.u32 %s1, 4
      %s32 = int_to_ptr.hbm [resolvable:$true] %s31
      %s33 = sshll.u32 [#allocation5], 4
      %s34 = int_to_ptr.vmem [resolvable:$true] %s33
      %39 = dma.hbm_to_vmem [thread:$0]  %s32, 1408, %s34, [#allocation6], 64, 64, 4
    $region9: #{tpu_custom_call.1} parent=1 // pred_fallthru
      _
    // Predicated region
    $region10: #{tpu_custom_call.1} parent=1 // pred_check
      _
    $region11: #{tpu_custom_call.1} parent=1 // pred_check_branch
      %41 = sbr.rel (0) target = $region13
    $region12: #{tpu_custom_call.1} parent=1 // pred_region
      _
    $region13: #{tpu_custom_call.1} parent=1 // pred_fallthru
      _
    // Predicated region
    $region14: #{tpu_custom_call.1} parent=1 // pred_check
      _
    $region15: #{tpu_custom_call.1} parent=1 // pred_check_branch
      %43 = sbr.rel (0) target = $region17
    $region16: #{tpu_custom_call.1} parent=1 // pred_region
      %45 = vsyncadd [#allocation6], 0
      %s46 = sshll.u32 %s3, 4
      %s47 = int_to_ptr.hbm [resolvable:$true] %s46
      %s48 = sshll.u32 [#allocation7], 4
      %s49 = int_to_ptr.vmem [resolvable:$true] %s48
      %54 = dma.hbm_to_vmem [thread:$0]  %s47, 1024, %s49, [#allocation6], 64, 64, 4
    $region17: #{tpu_custom_call.1} parent=1 // pred_fallthru
      _
    // Predicated region
    $region18: #{tpu_custom_call.1} parent=1 // pred_check
      _
    $region19: #{tpu_custom_call.1} parent=1 // pred_check_branch
      %56 = sbr.rel (0) target = $region21
    $region20: #{tpu_custom_call.1} parent=1 // pred_region
      _
    $region21: #{tpu_custom_call.1} parent=1 // pred_fallthru
      _
    // Predicated region
    $region22: #{tpu_custom_call.1} parent=1 // pred_check
      _
    $region23: #{tpu_custom_call.1} parent=1 // pred_check_branch
      %58 = sbr.rel (0) target = $region25
    $region24: #{tpu_custom_call.1} parent=1 // pred_region
      %60 = vsyncadd [#allocation9], 0
      %s61 = sshll.u32 %s5, 4
      %s62 = int_to_ptr.hbm [resolvable:$true] %s61
      %s63 = sshll.u32 [#allocation8], 4
      %s64 = int_to_ptr.vmem [resolvable:$true] %s63
      %69 = dma.hbm_to_vmem [thread:$0]  %s62, 1024, %s64, [#allocation9], 64, 64, 4
    $region25: #{tpu_custom_call.1} parent=1 // pred_fallthru
      _
    // Predicated region
    $region26: #{tpu_custom_call.1} parent=1 // pred_check
      _
    $region27: #{tpu_custom_call.1} parent=1 // pred_check_branch
      %71 = sbr.rel (0) target = $region29
    $region28: #{tpu_custom_call.1} parent=1 // pred_region
      _
    $region29: #{tpu_custom_call.1} parent=1 // pred_fallthru
      _
    // Predicated region
    $region30: #{tpu_custom_call.1} parent=1 // pred_check
      _
    $region31: #{tpu_custom_call.1} parent=1 // pred_check_branch
      %73 = sbr.rel (0) target = $region33
    $region32: #{tpu_custom_call.1} parent=1 // pred_region
      %75 = dma.done [#allocation3], 128
    $region33: #{tpu_custom_call.1} parent=1 // pred_fallthru
      _
    // Predicated region
    $region34: #{tpu_custom_call.1} parent=1 // pred_check
      _
    $region35: #{tpu_custom_call.1} parent=1 // pred_check_branch
      %77 = sbr.rel (0) target = $region37
    $region36: #{tpu_custom_call.1} parent=1 // pred_region
      %79 = dma.done [#allocation6], 1408
    $region37: #{tpu_custom_call.1} parent=1 // pred_fallthru
      _
    // Predicated region
    $region38: #{tpu_custom_call.1} parent=1 // pred_check
      _
    $region39: #{tpu_custom_call.1} parent=1 // pred_check_branch
      %81 = sbr.rel (0) target = $region41
    $region40: #{tpu_custom_call.1} parent=1 // pred_region
      %83 = dma.done [#allocation6], 1024
    $region41: #{tpu_custom_call.1} parent=1 // pred_fallthru
      _
    // Predicated region
    $region42: #{tpu_custom_call.1} parent=1 // pred_check
      _
    $region43: #{tpu_custom_call.1} parent=1 // pred_check_branch
      %85 = sbr.rel (0) target = $region45
    $region44: #{tpu_custom_call.1} parent=1 // pred_region
      %87 = dma.done [#allocation9], 1024
    $region45: #{tpu_custom_call.1} parent=1 // pred_fallthru
      _
    %v89 = vld [vmem:[#allocation2] sm:$0xff]
    %v90 = vld [vmem:[#allocation5] sm:$0xf]
    %v91 = vld [vmem:[#allocation5 + $0x4] sm:$0xf]
    %v92 = vld [vmem:[#allocation5 + $0x8] sm:$0xf]
    %v93 = vld [vmem:[#allocation5 + $0xc] sm:$0xf]
    %v94 = vld [vmem:[#allocation5 + $0x10] sm:$0xf]
    %v95 = vld [vmem:[#allocation5 + $0x14] sm:$0xf]
    %v96 = vld [vmem:[#allocation5 + $0x18] sm:$0xf]
    %v97 = vld [vmem:[#allocation5 + $0x1c] sm:$0xf]
    %v98 = vld [vmem:[#allocation5 + $0x20] sm:$0xf]
    %v99 = vld [vmem:[#allocation5 + $0x24] sm:$0xf]
    %v100 = vld [vmem:[#allocation5 + $0x28] sm:$0xf]
    %v101 = vld [vmem:[#allocation5 + $0x2c] sm:$0xf]
    %v102 = vld [vmem:[#allocation5 + $0x30] sm:$0xf]
    %v103 = vld [vmem:[#allocation5 + $0x34] sm:$0xf]
    %v104 = vld [vmem:[#allocation5 + $0x38] sm:$0xf]
    %v105 = vld [vmem:[#allocation5 + $0x3c] sm:$0xf]
    %v106 = vld [vmem:[#allocation5 + $0x40] sm:$0xf]
    %v107 = vld [vmem:[#allocation5 + $0x44] sm:$0xf]
    %v108 = vld [vmem:[#allocation5 + $0x48] sm:$0xf]
    %v109 = vld [vmem:[#allocation5 + $0x4c] sm:$0xf]
    %v110 = vld [vmem:[#allocation5 + $0x50] sm:$0xf]
    %v111 = vld [vmem:[#allocation5 + $0x54] sm:$0xf]
    %v112 = vld [vmem:[%s2] sm:$0x1]
    %v114 = vperm.slane %v112, 0
    %v117 = vunpack.c.l.b16 %v89
    %v118 = vunpack.c.h.b16 %v89
    %v119 = vpack.c.b16 %v117, %v117
    %v120 = vpack.c.b16 %v118, %v118
    %v144 = vunpack.c.l.b16 %v90
    %v145 = vunpack.c.l.b16 %v91
    %v146 = vunpack.c.l.b16 %v92
    %v147 = vunpack.c.l.b16 %v93
    %v148 = vunpack.c.l.b16 %v94
    %v149 = vunpack.c.l.b16 %v95
    %v150 = vunpack.c.l.b16 %v96
    %v151 = vunpack.c.l.b16 %v97
    %v152 = vunpack.c.l.b16 %v98
    %v153 = vunpack.c.l.b16 %v99
    %v154 = vunpack.c.l.b16 %v100
    %v155 = vunpack.c.l.b16 %v101
    %v156 = vunpack.c.l.b16 %v102
    %v157 = vunpack.c.l.b16 %v103
    %v158 = vunpack.c.l.b16 %v104
    %v159 = vunpack.c.l.b16 %v105
    %v160 = vunpack.c.l.b16 %v106
    %v161 = vunpack.c.l.b16 %v107
    %v162 = vunpack.c.l.b16 %v108
    %v163 = vunpack.c.l.b16 %v109
    %v164 = vunpack.c.l.b16 %v110
    %v165 = vunpack.c.l.b16 %v111
    %v166 = vpack.c.b16 %v145, %v144
    %v167 = vpack.c.b16 %v147, %v146
    %v168 = vpack.c.b16 %v149, %v148
    %v169 = vpack.c.b16 %v151, %v150
    %v170 = vpack.c.b16 %v153, %v152
    %v171 = vpack.c.b16 %v155, %v154
    %v172 = vpack.c.b16 %v157, %v156
    %v173 = vpack.c.b16 %v159, %v158
    %v174 = vpack.c.b16 %v161, %v160
    %v175 = vpack.c.b16 %v163, %v162
    %v176 = vpack.c.b16 %v165, %v164
    %vm188 = vcmask 392192
    %v190 = vsel %vm188, %v120, 0
    %192 = vmatpush.bf16.msra.mxu0 %v173
    %193 = vmatpush.bf16.msra.mxu0 %v172
    %194 = vmatpush.bf16.msra.mxu0 %v171
    %195 = vmatpush.bf16.msra.mxu0 %v170
    %196 = vmatpush.bf16.msra.mxu0 %v169
    %197 = vmatpush.bf16.msra.mxu0 %v168
    %198 = vmatpush.bf16.msra.mxu0 %v167
    %199 = vmatpush.bf16.msra.mxu0 %v166
    %200 = vmatmul.bf16.gmra.mxu0 %v119
    %v201 = vpop.f32.mrf.mxu0
    %v202 = vadd.f32 %v114, %v201
    %v203 = vpop.f32.mrf.mxu0
    %204 = vdwg.mxu0
    %205 = vmatpush.bf16.msra.mxu0 0
    %206 = vmatpush.bf16.msra.mxu0 0
    %207 = vmatpush.bf16.msra.mxu0 0
    %208 = vmatpush.bf16.msra.mxu0 0
    %209 = vmatpush.bf16.msra.mxu0 0
    %210 = vmatpush.bf16.msra.mxu0 %v176
    %211 = vmatpush.bf16.msra.mxu0 %v175
    %212 = vmatpush.bf16.msra.mxu0 %v174
    %213 = vmatmul.bf16.gmra.mxu0 %v190
    %v214 = vpop.f32.mrf.mxu0
    %v215 = vadd.f32 %v202, %v214
    %v216 = vpop.f32.mrf.mxu0
    %217 = vdwg.mxu0
    %v218 = vmax.f32 %v215, 0.0
    %v219 = vpack.c.bf16 %v218, %v218
    %v220 = vld [vmem:[#allocation7] sm:$0xf]
    %v221 = vld [vmem:[#allocation7 + $0x4] sm:$0xf]
    %v222 = vld [vmem:[#allocation7 + $0x8] sm:$0xf]
    %v223 = vld [vmem:[#allocation7 + $0xc] sm:$0xf]
    %v224 = vld [vmem:[#allocation7 + $0x10] sm:$0xf]
    %v225 = vld [vmem:[#allocation7 + $0x14] sm:$0xf]
    %v226 = vld [vmem:[#allocation7 + $0x18] sm:$0xf]
    %v227 = vld [vmem:[#allocation7 + $0x1c] sm:$0xf]
    %v228 = vld [vmem:[#allocation7 + $0x20] sm:$0xf]
    %v229 = vld [vmem:[#allocation7 + $0x24] sm:$0xf]
    %v230 = vld [vmem:[#allocation7 + $0x28] sm:$0xf]
    %v231 = vld [vmem:[#allocation7 + $0x2c] sm:$0xf]
    %v232 = vld [vmem:[#allocation7 + $0x30] sm:$0xf]
    %v233 = vld [vmem:[#allocation7 + $0x34] sm:$0xf]
    %v234 = vld [vmem:[#allocation7 + $0x38] sm:$0xf]
    %v235 = vld [vmem:[#allocation7 + $0x3c] sm:$0xf]
    %v236 = vld [vmem:[%s4] sm:$0x1]
    %v238 = vperm.slane %v236, 0
    %v256 = vunpack.c.l.b16 %v220
    %v257 = vunpack.c.l.b16 %v221
    %v258 = vunpack.c.l.b16 %v222
    %v259 = vunpack.c.l.b16 %v223
    %v260 = vunpack.c.l.b16 %v224
    %v261 = vunpack.c.l.b16 %v225
    %v262 = vunpack.c.l.b16 %v226
    %v263 = vunpack.c.l.b16 %v227
    %v264 = vunpack.c.l.b16 %v228
    %v265 = vunpack.c.l.b16 %v229
    %v266 = vunpack.c.l.b16 %v230
    %v267 = vunpack.c.l.b16 %v231
    %v268 = vunpack.c.l.b16 %v232
    %v269 = vunpack.c.l.b16 %v233
    %v270 = vunpack.c.l.b16 %v234
    %v271 = vunpack.c.l.b16 %v235
    %v272 = vpack.c.b16 %v257, %v256
    %v273 = vpack.c.b16 %v259, %v258
    %v274 = vpack.c.b16 %v261, %v260
    %v275 = vpack.c.b16 %v263, %v262
    %v276 = vpack.c.b16 %v265, %v264
    %v277 = vpack.c.b16 %v267, %v266
    %v278 = vpack.c.b16 %v269, %v268
    %v279 = vpack.c.b16 %v271, %v270
    %288 = vmatpush.bf16.msra.mxu0 %v279
    %289 = vmatpush.bf16.msra.mxu0 %v278
    %290 = vmatpush.bf16.msra.mxu0 %v277
    %291 = vmatpush.bf16.msra.mxu0 %v276
    %292 = vmatpush.bf16.msra.mxu0 %v275
    %293 = vmatpush.bf16.msra.mxu0 %v274
    %294 = vmatpush.bf16.msra.mxu0 %v273
    %295 = vmatpush.bf16.msra.mxu0 %v272
    %296 = vmatmul.bf16.gmra.mxu0 %v219
    %v297 = vpop.f32.mrf.mxu0
    %v298 = vadd.f32 %v238, %v297
    %v299 = vpop.f32.mrf.mxu0
    %300 = vdwg.mxu0
    %v301 = vmax.f32 %v298, 0.0
    %v302 = vpack.c.bf16 %v301, %v301
    %v303 = vld [vmem:[#allocation8] sm:$0xf]
    %v304 = vld [vmem:[#allocation8 + $0x4] sm:$0xf]
    %v305 = vld [vmem:[#allocation8 + $0x8] sm:$0xf]
    %v306 = vld [vmem:[#allocation8 + $0xc] sm:$0xf]
    %v307 = vld [vmem:[#allocation8 + $0x10] sm:$0xf]
    %v308 = vld [vmem:[#allocation8 + $0x14] sm:$0xf]
    %v309 = vld [vmem:[#allocation8 + $0x18] sm:$0xf]
    %v310 = vld [vmem:[#allocation8 + $0x1c] sm:$0xf]
    %v311 = vld [vmem:[#allocation8 + $0x20] sm:$0xf]
    %v312 = vld [vmem:[#allocation8 + $0x24] sm:$0xf]
    %v313 = vld [vmem:[#allocation8 + $0x28] sm:$0xf]
    %v314 = vld [vmem:[#allocation8 + $0x2c] sm:$0xf]
    %v315 = vld [vmem:[#allocation8 + $0x30] sm:$0xf]
    %v316 = vld [vmem:[#allocation8 + $0x34] sm:$0xf]
    %v317 = vld [vmem:[#allocation8 + $0x38] sm:$0xf]
    %v318 = vld [vmem:[#allocation8 + $0x3c] sm:$0xf]
    %v319 = vld [vmem:[%s6] sm:$0x1]
    %v321 = vperm.slane %v319, 0
    %v339 = vunpack.c.l.b16 %v303
    %v340 = vunpack.c.l.b16 %v304
    %v341 = vunpack.c.l.b16 %v305
    %v342 = vunpack.c.l.b16 %v306
    %v343 = vunpack.c.l.b16 %v307
    %v344 = vunpack.c.l.b16 %v308
    %v345 = vunpack.c.l.b16 %v309
    %v346 = vunpack.c.l.b16 %v310
    %v347 = vunpack.c.l.b16 %v311
    %v348 = vunpack.c.l.b16 %v312
    %v349 = vunpack.c.l.b16 %v313
    %v350 = vunpack.c.l.b16 %v314
    %v351 = vunpack.c.l.b16 %v315
    %v352 = vunpack.c.l.b16 %v316
    %v353 = vunpack.c.l.b16 %v317
    %v354 = vunpack.c.l.b16 %v318
    %v355 = vpack.c.b16 %v340, %v339
    %v356 = vpack.c.b16 %v342, %v341
    %v357 = vpack.c.b16 %v344, %v343
    %v358 = vpack.c.b16 %v346, %v345
    %v359 = vpack.c.b16 %v348, %v347
    %v360 = vpack.c.b16 %v350, %v349
    %v361 = vpack.c.b16 %v352, %v351
    %v362 = vpack.c.b16 %v354, %v353
    %371 = vmatpush.bf16.msra.mxu0 %v362
    %372 = vmatpush.bf16.msra.mxu0 %v361
    %373 = vmatpush.bf16.msra.mxu0 %v360
    %374 = vmatpush.bf16.msra.mxu0 %v359
    %375 = vmatpush.bf16.msra.mxu0 %v358
    %376 = vmatpush.bf16.msra.mxu0 %v357
    %377 = vmatpush.bf16.msra.mxu0 %v356
    %378 = vmatpush.bf16.msra.mxu0 %v355
    %379 = vmatmul.bf16.gmra.mxu0 %v302
    %v380 = vpop.f32.mrf.mxu0
    %v381 = vadd.f32 %v321, %v380
    %v382 = vpop.f32.mrf.mxu0
    %383 = vdwg.mxu0
    %384 = vst [vmem:[#allocation10] sm:$0xff] %v381
    // Predicated region
    $region46: #{tpu_custom_call.1} parent=1 // pred_check
      _
    $region47: #{tpu_custom_call.1} parent=1 // pred_check_branch
      %386 = sbr.rel (0) target = $region49
    $region48: #{tpu_custom_call.1} parent=1 // pred_region
      %388 = vsyncadd [#allocation4], 0
      %s390 = sshll.u32 [#allocation10], 4
      %s391 = int_to_ptr.vmem [resolvable:$true] %s390
      %s392 = sshll.u32 %s7, 4
      %s393 = int_to_ptr.hbm [resolvable:$true] %s392
      %395 = dma.vmem_to_hbm [thread:$0]  %s391, 128, %s393, [#allocation4]
    $region49: #{tpu_custom_call.1} parent=1 // pred_fallthru
      _
    // Predicated region
    $region50: #{tpu_custom_call.1} parent=1 // pred_check
      _
    $region51: #{tpu_custom_call.1} parent=1 // pred_check_branch
      %397 = sbr.rel (0) target = $region53
    $region52: #{tpu_custom_call.1} parent=1 // pred_region
      %399 = dma.done [#allocation4], 128
    $region53: #{tpu_custom_call.1} parent=1 // pred_fallthru
      _
    %400 = vsyncpa [#allocation3], 1
    %401 = vsyncpa [#allocation6], 1
    %402 = vsyncpa [#allocation9], 1
    %403 = vsyncpa [#allocation4], 1

</llo_original>
